<compile_context>
chip_gen: v7x
topology: tpu7x:2x2x1
jax: 0.10.0
libtpu: 0.0.40
codegen_flags: <defaults>
</compile_context>

<pallas_src>
import functools

import jax
import jax.numpy as jnp
from jax.experimental import pallas as pl
from jax.experimental.pallas import tpu as pltpu


def _round_up(a, b):
    return ((a + b - 1) // b) * b


def _channel_max_mean_kernel(x_ref, max_ref, mean_ref, max_acc, sum_acc, *,
                             c_valid, c_chunk, inv_c, needs_mask):
    c = pl.program_id(2)

    xv = x_ref[...].astype(jnp.float32)                  # (1, c_chunk, T)

    if needs_mask:
        # Mask padded channel rows: -inf for max, 0 for sum.
        row = jax.lax.broadcasted_iota(jnp.int32, xv.shape, 1) + c * c_chunk
        valid = row < c_valid
        x_max = jnp.where(valid, xv, -jnp.inf)
        x_sum = jnp.where(valid, xv, 0.0)
    else:
        x_max = xv
        x_sum = xv

    chunk_max = jnp.max(x_max, axis=1, keepdims=True)    # (1, 1, T)
    chunk_sum = jnp.sum(x_sum, axis=1, keepdims=True)    # (1, 1, T)

    @pl.when(c == 0)
    def _():
        max_acc[...] = jnp.full(max_acc.shape, -jnp.inf, jnp.float32)
        sum_acc[...] = jnp.zeros(sum_acc.shape, jnp.float32)

    # Elementwise (VPU) accumulation across the C-chunk grid axis.
    max_acc[...] = jnp.maximum(max_acc[...], chunk_max)
    sum_acc[...] = sum_acc[...] + chunk_sum

    @pl.when(c == pl.num_programs(2) - 1)
    def _():
        max_ref[...] = max_acc[...].astype(max_ref.dtype)
        mean_ref[...] = (sum_acc[...] * inv_c).astype(mean_ref.dtype)


def channel_max_mean(x, *, lane_tile=512, c_chunk_cap=128):
    """Fused max & mean over dim=1 (keepdim=True) of an (N, C, *spatial) array.

    Returns (max_out, mean_out), each of shape (N, 1, *spatial), dtype of x.
    """
    N, C = x.shape[0], x.shape[1]
    spatial = x.shape[2:]
    P = 1
    for s in spatial:
        P *= s

    x2 = x.reshape(N, C, P)

    # Lane-dense spatial tiling: multiple of 128, capped at `lane_tile`.
    T = min(_round_up(P, 128), lane_tile)
    P_pad = _round_up(P, T)
    # Channel chunking: multiple of 8 (sublane tile), capped -> bounded VMEM.
    c_chunk = min(_round_up(C, 8), c_chunk_cap)
    C_pad = _round_up(C, c_chunk)

    if (C_pad != C) or (P_pad != P):
        x2 = jnp.pad(x2, ((0, 0), (0, C_pad - C), (0, P_pad - P)))

    grid = (N, P_pad // T, C_pad // c_chunk)

    kernel = functools.partial(
        _channel_max_mean_kernel,
        c_valid=C,
        c_chunk=c_chunk,
        inv_c=1.0 / C,
        needs_mask=(C_pad != C),
    )

    max_pad, mean_pad = pl.pallas_call(
        kernel,
        out_shape=(
            jax.ShapeDtypeStruct((N, 1, P_pad), x.dtype),
            jax.ShapeDtypeStruct((N, 1, P_pad), x.dtype),
        ),
        grid=grid,
        in_specs=[pl.BlockSpec((1, c_chunk, T), lambda n, j, c: (n, c, j))],
        out_specs=(
            pl.BlockSpec((1, 1, T), lambda n, j, c: (n, 0, j)),
            pl.BlockSpec((1, 1, T), lambda n, j, c: (n, 0, j)),
        ),
        scratch_shapes=[
            pltpu.VMEM((1, 1, T), jnp.float32),   # running max
            pltpu.VMEM((1, 1, T), jnp.float32),   # running sum
        ],
        compiler_params=pltpu.CompilerParams(
            dimension_semantics=("parallel", "parallel", "arbitrary")),
    )(x2)

    out_shape = (N, 1) + spatial
    max_out = max_pad[:, :, :P].reshape(out_shape)
    mean_out = mean_pad[:, :, :P].reshape(out_shape)
    return max_out, mean_out


if __name__ == "__main__":
    key = jax.random.PRNGKey(0)
    kx, kg = jax.random.split(key)

    # Small shapes consistent with BottleneckRFCBAMConv:
    #   module input x:                  (N, C, H, W)      = (2, 4, 16, 16)
    #   RFCBAMConv generate_feature view (N, C, K*K, H, W) with K = 3
    N, C, H, W, K = 2, 4, 16, 16, 3
    x = jax.random.normal(kx, (N, C, H, W), dtype=jnp.float32)
    gf = jax.nn.relu(
        jax.random.normal(kg, (N, C, K * K, H, W), dtype=jnp.float32))

    # 4-D NCHW case.
    mx, mn = channel_max_mean(x)
    jax.block_until_ready((mx, mn))
    assert mx.shape == (N, 1, H, W) and mn.shape == (N, 1, H, W)
    assert mx.dtype == x.dtype and mn.dtype == x.dtype
    assert jnp.allclose(mx, jnp.max(x, axis=1, keepdims=True)), "max mismatch (4D)"
    assert jnp.allclose(mn, jnp.mean(x, axis=1, keepdims=True),
                        rtol=1e-6, atol=1e-6), "mean mismatch (4D)"

    # 5-D case mirroring generate_feature.view(b, c, k*k, h, w) in RFCBAMConv.
    gmx, gmn = channel_max_mean(gf)
    jax.block_until_ready((gmx, gmn))
    assert gmx.shape == (N, 1, K * K, H, W) and gmn.shape == (N, 1, K * K, H, W)
    assert jnp.allclose(gmx, jnp.max(gf, axis=1, keepdims=True)), "max mismatch (5D)"
    assert jnp.allclose(gmn, jnp.mean(gf, axis=1, keepdims=True),
                        rtol=1e-6, atol=1e-6), "mean mismatch (5D)"

    print("KERNEL_OK")
</pallas_src>

<mosaic_0001>
module attributes {stable_mosaic.version = 11 : i64} {
  func.func @_channel_max_mean_kernel(%arg0: i32, %arg1: i32, %arg2: i32, %arg3: memref<1x8x256xf32, #tpu.memory_space<vmem>>, %arg4: memref<1x1x256xf32, #tpu.memory_space<vmem>>, %arg5: memref<1x1x256xf32, #tpu.memory_space<vmem>>, %arg6: memref<1x1x256xf32, #tpu.memory_space<vmem>>, %arg7: memref<1x1x256xf32, #tpu.memory_space<vmem>>) attributes {dimension_semantics = [#tpu.dimension_semantics<parallel>, #tpu.dimension_semantics<parallel>, #tpu.dimension_semantics<arbitrary>], iteration_bounds = array<i64: 2, 1, 1>, scalar_prefetch = 0 : i64, scratch_operands = 2 : i64, tpu.core_type = #tpu.core_type<tc>, window_params = [{transform_indices = @transform_0, window_bounds = array<i64: 1, 8, 256>}, {transform_indices = @transform_1, window_bounds = array<i64: 1, 1, 256>}, {transform_indices = @transform_2, window_bounds = array<i64: 1, 1, 256>}]} {
    %c0 = arith.constant 0 : index
    %c0_0 = arith.constant 0 : index
    %c0_1 = arith.constant 0 : index
    %0 = vector.load %arg3[%c0, %c0_0, %c0_1] : memref<1x8x256xf32, #tpu.memory_space<vmem>>, vector<1x8x256xf32>
    %1 = tpu.iota {dimensions = array<i32: 1>} : vector<1x8x256xi32>
    %c8_i32 = arith.constant 8 : i32
    %2 = arith.muli %arg2, %c8_i32 : i32
    %3 = vector.broadcast %2 : i32 to vector<1x8x256xi32>
    %4 = arith.addi %1, %3 : vector<1x8x256xi32>
    %c4_i32 = arith.constant 4 : i32
    %5 = vector.broadcast %c4_i32 : i32 to vector<1x8x256xi32>
    %6 = arith.cmpi slt, %4, %5 : vector<1x8x256xi32>
    %cst = arith.constant 0xFF800000 : f32
    %7 = vector.broadcast %cst : f32 to vector<1x8x256xf32>
    %8 = arith.select %6, %0, %7 : vector<1x8x256xi1>, vector<1x8x256xf32>
    %cst_2 = arith.constant 0.000000e+00 : f32
    %9 = vector.broadcast %cst_2 : f32 to vector<1x8x256xf32>
    %10 = arith.select %6, %0, %9 : vector<1x8x256xi1>, vector<1x8x256xf32>
    %cst_3 = arith.constant dense<0xFF800000> : vector<1x256xf32>
    %11 = vector.multi_reduction <maximumf>, %8, %cst_3 [1] : vector<1x8x256xf32> to vector<1x256xf32>
    %12 = vector.shape_cast %11 : vector<1x256xf32> to vector<1x1x256xf32>
    %cst_4 = arith.constant dense<0.000000e+00> : vector<1x256xf32>
    %13 = vector.multi_reduction <add>, %10, %cst_4 [1] : vector<1x8x256xf32> to vector<1x256xf32>
    %14 = vector.shape_cast %13 : vector<1x256xf32> to vector<1x1x256xf32>
    %c0_i32 = arith.constant 0 : i32
    %15 = arith.cmpi eq, %arg2, %c0_i32 : i32
    %16 = arith.extui %15 : i1 to i32
    %c0_i32_5 = arith.constant 0 : i32
    %17 = arith.cmpi ne, %16, %c0_i32_5 : i32
    scf.if %17 {
      %cst_20 = arith.constant 0xFF800000 : f32
      %27 = vector.broadcast %cst_20 : f32 to vector<1x1x256xf32>
      %c0_21 = arith.constant 0 : index
      %c0_22 = arith.constant 0 : index
      %c0_23 = arith.constant 0 : index
      %28 = vector.load %arg6[%c0_21, %c0_22, %c0_23] : memref<1x1x256xf32, #tpu.memory_space<vmem>>, vector<1x1x256xf32>
      tpu.vector_store %arg6[%c0_21, %c0_22, %c0_23], %27 {strides = array<i32>} : memref<1x1x256xf32, #tpu.memory_space<vmem>>, vector<1x1x256xf32>,
      %cst_24 = arith.constant 0.000000e+00 : f32
      %29 = vector.broadcast %cst_24 : f32 to vector<1x1x256xf32>
      %c0_25 = arith.constant 0 : index
      %c0_26 = arith.constant 0 : index
      %c0_27 = arith.constant 0 : index
      %30 = vector.load %arg7[%c0_25, %c0_26, %c0_27] : memref<1x1x256xf32, #tpu.memory_space<vmem>>, vector<1x1x256xf32>
      tpu.vector_store %arg7[%c0_25, %c0_26, %c0_27], %29 {strides = array<i32>} : memref<1x1x256xf32, #tpu.memory_space<vmem>>, vector<1x1x256xf32>,
    } else {
    }
    %c0_6 = arith.constant 0 : index
    %c0_7 = arith.constant 0 : index
    %c0_8 = arith.constant 0 : index
    %18 = vector.load %arg6[%c0_6, %c0_7, %c0_8] : memref<1x1x256xf32, #tpu.memory_space<vmem>>, vector<1x1x256xf32>
    %19 = arith.maximumf %18, %12 : vector<1x1x256xf32>
    %c0_9 = arith.constant 0 : index
    %c0_10 = arith.constant 0 : index
    %c0_11 = arith.constant 0 : index
    %20 = vector.load %arg6[%c0_9, %c0_10, %c0_11] : memref<1x1x256xf32, #tpu.memory_space<vmem>>, vector<1x1x256xf32>
    tpu.vector_store %arg6[%c0_9, %c0_10, %c0_11], %19 {strides = array<i32>} : memref<1x1x256xf32, #tpu.memory_space<vmem>>, vector<1x1x256xf32>,
    %c0_12 = arith.constant 0 : index
    %c0_13 = arith.constant 0 : index
    %c0_14 = arith.constant 0 : index
    %21 = vector.load %arg7[%c0_12, %c0_13, %c0_14] : memref<1x1x256xf32, #tpu.memory_space<vmem>>, vector<1x1x256xf32>
    %22 = arith.addf %21, %14 : vector<1x1x256xf32>
    %c0_15 = arith.constant 0 : index
    %c0_16 = arith.constant 0 : index
    %c0_17 = arith.constant 0 : index
    %23 = vector.load %arg7[%c0_15, %c0_16, %c0_17] : memref<1x1x256xf32, #tpu.memory_space<vmem>>, vector<1x1x256xf32>
    tpu.vector_store %arg7[%c0_15, %c0_16, %c0_17], %22 {strides = array<i32>} : memref<1x1x256xf32, #tpu.memory_space<vmem>>, vector<1x1x256xf32>,
    %c0_i32_18 = arith.constant 0 : i32
    %24 = arith.cmpi eq, %arg2, %c0_i32_18 : i32
    %25 = arith.extui %24 : i1 to i32
    %c0_i32_19 = arith.constant 0 : i32
    %26 = arith.cmpi ne, %25, %c0_i32_19 : i32
    scf.if %26 {
      %c0_20 = arith.constant 0 : index
      %c0_21 = arith.constant 0 : index
      %c0_22 = arith.constant 0 : index
      %27 = vector.load %arg6[%c0_20, %c0_21, %c0_22] : memref<1x1x256xf32, #tpu.memory_space<vmem>>, vector<1x1x256xf32>
      %c0_23 = arith.constant 0 : index
      %c0_24 = arith.constant 0 : index
      %c0_25 = arith.constant 0 : index
      %28 = vector.load %arg4[%c0_23, %c0_24, %c0_25] : memref<1x1x256xf32, #tpu.memory_space<vmem>>, vector<1x1x256xf32>
      tpu.vector_store %arg4[%c0_23, %c0_24, %c0_25], %27 {strides = array<i32>} : memref<1x1x256xf32, #tpu.memory_space<vmem>>, vector<1x1x256xf32>,
      %c0_26 = arith.constant 0 : index
      %c0_27 = arith.constant 0 : index
      %c0_28 = arith.constant 0 : index
      %29 = vector.load %arg7[%c0_26, %c0_27, %c0_28] : memref<1x1x256xf32, #tpu.memory_space<vmem>>, vector<1x1x256xf32>
      %cst_29 = arith.constant 2.500000e-01 : f32
      %30 = vector.broadcast %cst_29 : f32 to vector<1x1x256xf32>
      %31 = arith.mulf %29, %30 : vector<1x1x256xf32>
      %c0_30 = arith.constant 0 : index
      %c0_31 = arith.constant 0 : index
      %c0_32 = arith.constant 0 : index
      %32 = vector.load %arg5[%c0_30, %c0_31, %c0_32] : memref<1x1x256xf32, #tpu.memory_space<vmem>>, vector<1x1x256xf32>
      tpu.vector_store %arg5[%c0_30, %c0_31, %c0_32], %31 {strides = array<i32>} : memref<1x1x256xf32, #tpu.memory_space<vmem>>, vector<1x1x256xf32>,
    } else {
    }
    return
  }
  func.func @transform_0(%arg0: i32, %arg1: i32, %arg2: i32) -> (i32, i32, i32) {
    %c0_i32 = arith.constant 0 : i32
    return %arg0, %arg2, %arg1 : i32, i32, i32
  }
  func.func @transform_1(%arg0: i32, %arg1: i32, %arg2: i32) -> (i32, i32, i32) {
    %c0_i32 = arith.constant 0 : i32
    %c0_i32_0 = arith.constant 0 : i32
    return %arg0, %c0_i32, %arg1 : i32, i32, i32
  }
  func.func @transform_2(%arg0: i32, %arg1: i32, %arg2: i32) -> (i32, i32, i32) {
    %c0_i32 = arith.constant 0 : i32
    %c0_i32_0 = arith.constant 0 : i32
    return %arg0, %c0_i32, %arg1 : i32, i32, i32
  }
}

</mosaic_0001>

<llo_original>
// kernel: tpu_custom_call.1
$region0: #{tpu_custom_call.1}
  #allocation0 [shape = 'u32[]', space=smem, size = 0x4, offset = 0x4, fixed_abs, tag = 'smem constant byte address 0x4 - core index']
  #allocation1 [shape = 'u32[144,128]{1,0:T(1,128)}', space=vmem, size = 0x12000, scoped, tag = 'internal scratch']
  #allocation2 [shape = 'f32[1,1,256]{2,1,0:T(1,128)}', space=vmem, size = 0x400, scoped, tag = 'scratch operand']
  #allocation3 [shape = 'f32[1,1,256]{2,1,0:T(1,128)}', space=vmem, size = 0x400, scoped, tag = 'scratch operand']
  %s0 = inlined_call_operand.hbm [shape: f32[2,8,256], index: 0, kind: input, shape index: {}]
  %s1 = inlined_call_operand.hbm [shape: f32[2,1,256], index: 1, kind: output, shape index: {0}]
  %s2 = inlined_call_operand.hbm [shape: f32[2,1,256], index: 2, kind: output, shape index: {1}]
  %3 = xla_tuple %s1, %s2
  %s4 = sld [smem:[#allocation0]]
  $region57: #{tpu_custom_call.1} parent=0
    _
  %s6 = ssub.s32 1, %s4
  %s7 = scalar_select 0, %s6, %s4
  $region1: #{tpu_custom_call.1} parent=0
    #allocation4 [shape = 'u8[16384]{0}', space=vmem, size = 0x4000, scoped, tag = 'input window, operand 0']
    #allocation5 [shape = 's32[2]{0}', space=sflag, size = 0x8, scoped, tag = 'scoped memory for tpu_custom_call.1']
    #allocation6 [shape = 's32[2]{0}', space=sflag, size = 0x8, scoped, tag = 'scoped memory for tpu_custom_call.1']
    #allocation7 [shape = 'u8[2048]{0}', space=vmem, size = 0x800, scoped, tag = 'output window, operand 0']
    #allocation8 [shape = 'u8[2048]{0}', space=vmem, size = 0x800, scoped, tag = 'output window, operand 1']
    #allocation9 [shape = 's32[2]{0}', space=sflag, size = 0x8, scoped, tag = 'scoped memory for tpu_custom_call.1']
    %8 = vsyncpa [#allocation5], 0
    %s9 = scalar_lea.sflag [#allocation5], 1
    %10 = vsyncpa %s9, 0
    %11 = vsyncpa [#allocation6], 0
    %s12 = scalar_lea.sflag [#allocation6], 1
    %13 = vsyncpa %s12, 0
    %14 = vsyncpa [#allocation9], 0
    %s15 = scalar_lea.sflag [#allocation9], 1
    %16 = vsyncpa %s15, 0
    loop: start=0, step=1, limit=4
    $region2: #{tpu_custom_call.1} parent=1 // loop_pre_header
      _
    $region3: #{tpu_custom_call.1} parent=1 // loop_header
      %s18 = sphi 0, %s22
      %p19 = scmp.ge.s32.totalorder %s18, 4
      %s25 = sphi 0, %s44
      %s26 = sphi 0, %s40
      %s27 = sphi 0, %s36
      %s28 = sphi 0, %s25
      %s29 = sphi 0, %s26
      %s30 = sphi 0, %s27
      %s31 = sphi 0, %s28
      %s32 = sphi 0, %s29
      %s33 = sphi 0, %s30
      %s51 = sphi 0, %s53
      %s54 = sphi 0, %s51
      %s55 = sphi 0, %s54
      %s71 = sphi 0, %s55
      %s79 = sphi 0, %s81
      %s82 = sphi 0, %s79
      %s83 = sphi 0, %s82
      %s99 = sphi 0, %s83
      %s107 = sphi 0, %s109
      %s110 = sphi 0, %s107
      %s111 = sphi 0, %s110
      %s127 = sphi 0, %s111
    $region4: #{tpu_custom_call.1} parent=1 // loop_header_branch
      %21 = sbr.rel (%p19) target = $region8
    $region5: #{tpu_custom_call.1} parent=1 // loop_body
      %s23 = ssub.s32 %s18, 1
      %s24 = ssub.s32 %s18, 2
      %s34 = sadd.s32 1, %s27
      %p35 = scmp.ge.s32.totalorder %s34, 1
      %s36 = scalar_select %p35, 0, %s34
      %s37 = sadd.s32 1, %s26
      %s38 = scalar_select %p35, %s37, %s26
      %p39 = scmp.ge.s32.totalorder %s38, 1
      %s40 = scalar_select %p39, 0, %s38
      %s41 = sadd.s32 1, %s25
      %s42 = scalar_select %p39, %s41, %s25
      %p43 = scmp.ge.s32.totalorder %s42, 2
      %s44 = scalar_select %p43, 0, %s42
      %s45 = ssub.s32 %s25, %s44
      %s46 = ssub.s32 %s27, %s36
      %s47 = sor.u32 %s45, %s46
      %s48 = ssub.s32 %s26, %s40
      %s49 = sor.u32 %s47, %s48
      %p50 = scmp.eq.s32.totalorder %s49, 0
      %s52 = sadd.s32 %s51, 1
      %s53 = scalar_select %p50, %s51, %s52
      %p56 = pneg %p50
      %p57 = scmp.eq.s32.totalorder %s18, 1
      %p58 = por %p56, %p57
      %p59 = scmp.ne.s32.totalorder %s51, %s54
      %p60 = scmp.eq.s32.totalorder %s18, 0
      %p61 = por %p59, %p60
      %p62 = scmp.ne.s32.totalorder %s51, %s54
      %p63 = scmp.eq.s32.totalorder %s23, 1
      %p64 = por %p62, %p63
      %p65 = scmp.ne.s32.totalorder %s54, %s55
      %p66 = scmp.eq.s32.totalorder %s23, 0
      %p67 = por %p65, %p66
      %p68 = scmp.ne.s32.totalorder %s54, %s55
      %p69 = scmp.eq.s32.totalorder %s24, 1
      %p70 = por %p68, %p69
      %p72 = scmp.ne.s32.totalorder %s55, %s71
      %p73 = scmp.eq.s32.totalorder %s24, 0
      %p74 = por %p72, %p73
      %s75 = ssub.s32 %s25, %s44
      %s76 = ssub.s32 %s26, %s40
      %s77 = sor.u32 %s75, %s76
      %p78 = scmp.eq.s32.totalorder %s77, 0
      %s80 = sadd.s32 %s79, 1
      %s81 = scalar_select %p78, %s79, %s80
      %p84 = pneg %p78
      %p85 = scmp.eq.s32.totalorder %s18, 1
      %p86 = por %p84, %p85
      %p87 = scmp.ne.s32.totalorder %s79, %s82
      %p88 = scmp.eq.s32.totalorder %s18, 0
      %p89 = por %p87, %p88
      %p90 = scmp.ne.s32.totalorder %s79, %s82
      %p91 = scmp.eq.s32.totalorder %s23, 1
      %p92 = por %p90, %p91
      %p93 = scmp.ne.s32.totalorder %s82, %s83
      %p94 = scmp.eq.s32.totalorder %s23, 0
      %p95 = por %p93, %p94
      %p96 = scmp.ne.s32.totalorder %s82, %s83
      %p97 = scmp.eq.s32.totalorder %s24, 1
      %p98 = por %p96, %p97
      %p100 = scmp.ne.s32.totalorder %s83, %s99
      %p101 = scmp.eq.s32.totalorder %s24, 0
      %p102 = por %p100, %p101
      %s103 = ssub.s32 %s25, %s44
      %s104 = ssub.s32 %s26, %s40
      %s105 = sor.u32 %s103, %s104
      %p106 = scmp.eq.s32.totalorder %s105, 0
      %s108 = sadd.s32 %s107, 1
      %s109 = scalar_select %p106, %s107, %s108
      %p112 = pneg %p106
      %p113 = scmp.eq.s32.totalorder %s18, 1
      %p114 = por %p112, %p113
      %p115 = scmp.ne.s32.totalorder %s107, %s110
      %p116 = scmp.eq.s32.totalorder %s18, 0
      %p117 = por %p115, %p116
      %p118 = scmp.ne.s32.totalorder %s107, %s110
      %p119 = scmp.eq.s32.totalorder %s23, 1
      %p120 = por %p118, %p119
      %p121 = scmp.ne.s32.totalorder %s110, %s111
      %p122 = scmp.eq.s32.totalorder %s23, 0
      %p123 = por %p121, %p122
      %p124 = scmp.ne.s32.totalorder %s110, %s111
      %p125 = scmp.eq.s32.totalorder %s24, 1
      %p126 = por %p124, %p125
      %p128 = scmp.ne.s32.totalorder %s111, %s127
      %p129 = scmp.eq.s32.totalorder %s24, 0
      %p130 = por %p128, %p129
      %p131 = scmp.le.s32.totalorder 1, %s18
      %p132 = scmp.lt.s32.totalorder %s18, 3
      %p133 = pnand %p131, %p132
      %p134 = pneg %p133
      // Predicated region
      $region9: #{tpu_custom_call.1} parent=5 // pred_check
        _
      $region10: #{tpu_custom_call.1} parent=5 // pred_check_branch
        %136 = sbr.rel (%p133) target = $region12
      $region11: #{tpu_custom_call.1} parent=5 // pred_region
        %s137 = ssub.s32 %s18, 1
      $region12: #{tpu_custom_call.1} parent=5 // pred_fallthru
        _
      %p138 = scmp.lt.s32.totalorder %s18, 2
      // Predicated region
      $region13: #{tpu_custom_call.1} parent=5 // pred_check
        %p139 = pneg %p138
      $region14: #{tpu_custom_call.1} parent=5 // pred_check_branch
        %141 = sbr.rel (%p139) target = $region16
      $region15: #{tpu_custom_call.1} parent=5 // pred_region
        // Predicated region
        $region17: #{tpu_custom_call.1} parent=15 // pred_check
          %p142 = pneg %p61
        $region18: #{tpu_custom_call.1} parent=15 // pred_check_branch
          %144 = sbr.rel (%p142) target = $region20
        $region19: #{tpu_custom_call.1} parent=15 // pred_region
          %s145 = sand.u32 %s51, 1
          %s146 = scalar_lea.sflag [#allocation5], %s145
          %s147 = sand.u32 %s51, 1
          %s148 = smul.addr %s147, 16
          %s149 = scalar_lea.vmem [#allocation4], %s148
          %s150 = smul.u32 2, %s26
          %s152 = ssub.s32 256, 256
          %153 = vsyncadd %s146, %s152
          %s154 = smul.addr %s27, 2
          %s155 = sadd.s32 %s150, %s154
          %s156 = smul.addr %s25, 2
          %s157 = sadd.s32 %s155, %s156
          %s158 = smul.addr %s157, 128
          %s159 = scalar_lea.hbm %s0, %s158
          %s161 = sshll.u32 %s149, 4
          %s162 = int_to_ptr.vmem [resolvable:$true] %s161
          %164 = dma.hbm_to_vmem [thread:$0]  %s159, 256, %s162, %s146
        $region20: #{tpu_custom_call.1} parent=15 // pred_fallthru
          _
      $region16: #{tpu_custom_call.1} parent=5 // pred_fallthru
        _
      %p165 = scmp.le.s32.totalorder 1, %s18
      %p166 = scmp.lt.s32.totalorder %s18, 3
      %p167 = pnand %p165, %p166
      %p168 = pneg %p167
      // Predicated region
      $region21: #{tpu_custom_call.1} parent=5 // pred_check
        _
      $region22: #{tpu_custom_call.1} parent=5 // pred_check_branch
        %170 = sbr.rel (%p167) target = $region24
      $region23: #{tpu_custom_call.1} parent=5 // pred_region
        %s171 = ssub.s32 %s18, 1
        %s172 = sand.u32 %s54, 1
        %s173 = scalar_lea.sflag [#allocation5], %s172
        %s174 = sand.u32 %s54, 1
        %s175 = smul.addr %s174, 16
        %s176 = scalar_lea.vmem [#allocation4], %s175
        // Predicated region
        $region25: #{tpu_custom_call.1} parent=23 // pred_check
          %p177 = pneg %p67
        $region26: #{tpu_custom_call.1} parent=23 // pred_check_branch
          %179 = sbr.rel (%p177) target = $region28
        $region27: #{tpu_custom_call.1} parent=23 // pred_region
          %180 = dma.done %s173, 256
        $region28: #{tpu_custom_call.1} parent=23 // pred_fallthru
          _
        %s181 = sand.u32 %s54, 1
        %s182 = scalar_lea.sflag [#allocation5], %s181
        %s183 = sand.u32 %s54, 1
        %s184 = smul.addr %s183, 16
        %s185 = scalar_lea.vmem [#allocation4], %s184
        %p186 = pneg %p67
        %p187 = pneg %p64
        %p188 = pneg %p95
        %p189 = pneg %p92
        %s190 = sand.u32 %s82, 1
        %s191 = scalar_lea.sflag [#allocation6], %s190
        %s192 = sand.u32 %s82, 1
        %s193 = smul.addr %s192, 2
        %s194 = scalar_lea.vmem [#allocation7], %s193
        %p195 = pneg %p123
        %p196 = pneg %p120
        %s197 = sand.u32 %s110, 1
        %s198 = scalar_lea.sflag [#allocation9], %s197
        %s199 = sand.u32 %s110, 1
        %s200 = smul.addr %s199, 2
        %s201 = scalar_lea.vmem [#allocation8], %s200
        %s202 = smul.u32 2, %s29
        %s203 = smul.u32 2, %s29
        %s204 = smul.u32 2, %s29
        %v205 = vld [vmem:[%s176] sm:$0xff]
        %v206 = vld [vmem:[%s176 + $0x8] sm:$0xff]
        %v207 = vlaneseq
        %v208 = vshrl.u32 %v207, 7
        %s209 = smul.u32 %s30, 8
        %v210 = vstv %s209
        %v211 = vadd.s32 %v208, %v210
        %vm212 = vcmp.lt.s32.totalorder %v211, 4
        %v213 = vsel %vm212, %v205, -inf
        %v214 = vsel %vm212, %v206, -inf
        %v215 = vsel %vm212, %v205, 0.0
        %v216 = vsel %vm212, %v206, 0.0
        %v217 = vrot.slane %v213, 4
        %v218 = vmax.f32 %v213, %v217
        %v219 = vrot.slane %v218, 2
        %v220 = vmax.f32 %v218, %v219
        %v221 = vrot.slane %v220, 1
        %v222 = vmax.f32 %v220, %v221
        %v223 = vrot.slane %v214, 4
        %v224 = vmax.f32 %v214, %v223
        %v225 = vrot.slane %v224, 2
        %v226 = vmax.f32 %v224, %v225
        %v227 = vrot.slane %v226, 1
        %v228 = vmax.f32 %v226, %v227
        %v229 = vrot.slane %v215, 4
        %v230 = vadd.f32 %v215, %v229
        %v231 = vrot.slane %v230, 2
        %v232 = vadd.f32 %v230, %v231
        %v233 = vrot.slane %v232, 1
        %v234 = vadd.f32 %v232, %v233
        %v235 = vrot.slane %v216, 4
        %v236 = vadd.f32 %v216, %v235
        %v237 = vrot.slane %v236, 2
        %v238 = vadd.f32 %v236, %v237
        %v239 = vrot.slane %v238, 1
        %v240 = vadd.f32 %v238, %v239
        %p241 = scmp.eq.s32.totalorder %s30, 0
        // Predicated region
        $region29: #{tpu_custom_call.1} parent=23 // pred_check
          %p242 = pneg %p241
        $region30: #{tpu_custom_call.1} parent=23 // pred_check_branch
          %244 = sbr.rel (%p242) target = $region32
        $region31: #{tpu_custom_call.1} parent=23 // pred_region
          %v245 = vlaneseq
          %vm246 = vcmp.ge.s32.totalorder %v245, 0
          %vm247 = vcmp.lt.s32.totalorder %v245, 256
          %vm248 = vmand %vm246, %vm247
          %249 = vst.msk [vmem:[#allocation2] sm:$0x3] %vm248, -inf
          %250 = vst.msk [vmem:[#allocation3] sm:$0x3] %vm248, 0.0
        $region32: #{tpu_custom_call.1} parent=23 // pred_fallthru
          _
        %v251 = vld [vmem:[#allocation2] sm:$0x3]
        %v254 = vcombine.low %v222, %v228
        %v256 = vunpack.c.l.s4 1966171168
        %v257 = vunpack.c.0.s8 %v256
        %v258 = vlaneseq
        %v259 = vshrl.u32 %v258, 7
        %v260 = vsub.s32 %v257, %v259
        %v261 = vrot.slane %v254, %v260
        %v263 = vunpack.c.l.s4 1966171168
        %v264 = vunpack.c.0.s8 %v263
        %v265 = vlaneseq
        %v266 = vshrl.u32 %v265, 7
        %v267 = vsub.s32 %v264, %v266
        %v268 = vrot.slane %v261, %v267
        %v270 = vmax.f32 %v251, %v268
        %v271 = vlaneseq
        %vm272 = vcmp.ge.s32.totalorder %v271, 0
        %vm273 = vcmp.lt.s32.totalorder %v271, 256
        %vm274 = vmand %vm272, %vm273
        %275 = vst.msk [vmem:[#allocation2] sm:$0x3] %vm274, %v270
        %v276 = vld [vmem:[#allocation3] sm:$0x3]
        %v279 = vcombine.low %v234, %v240
        %v281 = vunpack.c.l.s4 1966171168
        %v282 = vunpack.c.0.s8 %v281
        %v283 = vlaneseq
        %v284 = vshrl.u32 %v283, 7
        %v285 = vsub.s32 %v282, %v284
        %v286 = vrot.slane %v279, %v285
        %v288 = vunpack.c.l.s4 1966171168
        %v289 = vunpack.c.0.s8 %v288
        %v290 = vlaneseq
        %v291 = vshrl.u32 %v290, 7
        %v292 = vsub.s32 %v289, %v291
        %v293 = vrot.slane %v286, %v292
        %v295 = vadd.f32 %v276, %v293
        %296 = vst.msk [vmem:[#allocation3] sm:$0x3] %vm274, %v295
        // Predicated region
        $region33: #{tpu_custom_call.1} parent=23 // pred_check
          %p297 = pneg %p241
        $region34: #{tpu_custom_call.1} parent=23 // pred_check_branch
          %299 = sbr.rel (%p297) target = $region36
        $region35: #{tpu_custom_call.1} parent=23 // pred_region
          %v300 = vld [vmem:[#allocation2] sm:$0x3]
          %301 = vst.msk [vmem:[%s194] sm:$0x3] %vm274, %v300
          %v302 = vld [vmem:[#allocation3] sm:$0x3]
          %v303 = vmul.f32 %v302, 0.25
          %304 = vst.msk [vmem:[%s201] sm:$0x3] %vm274, %v303
        $region36: #{tpu_custom_call.1} parent=23 // pred_fallthru
          _
        %s305 = sand.u32 %s82, 1
        %s306 = scalar_lea.sflag [#allocation6], %s305
        %s307 = sand.u32 %s82, 1
        %s308 = smul.addr %s307, 2
        %s309 = scalar_lea.vmem [#allocation7], %s308
        %s310 = sand.u32 %s110, 1
        %s311 = scalar_lea.sflag [#allocation9], %s310
        %s312 = sand.u32 %s110, 1
        %s313 = smul.addr %s312, 2
        %s314 = scalar_lea.vmem [#allocation8], %s313
        // Predicated region
        $region37: #{tpu_custom_call.1} parent=23 // pred_check
          %p315 = pneg %p92
        $region38: #{tpu_custom_call.1} parent=23 // pred_check_branch
          %317 = sbr.rel (%p315) target = $region40
        $region39: #{tpu_custom_call.1} parent=23 // pred_region
          %s318 = smul.u32 2, %s29
          %s320 = ssub.s32 32, 32
          %321 = vsyncadd %s306, %s320
          %s322 = smul.addr %s28, 2
          %s323 = sadd.s32 %s318, %s322
          %s324 = smul.addr %s323, 16
          %s325 = scalar_lea.hbm %s1, %s324
          %s327 = sshll.u32 %s309, 4
          %s328 = int_to_ptr.vmem [resolvable:$true] %s327
          %330 = dma.vmem_to_hbm [thread:$0]  %s328, 32, %s325, %s306
        $region40: #{tpu_custom_call.1} parent=23 // pred_fallthru
          _
        // Predicated region
        $region41: #{tpu_custom_call.1} parent=23 // pred_check
          %p331 = pneg %p120
        $region42: #{tpu_custom_call.1} parent=23 // pred_check_branch
          %333 = sbr.rel (%p331) target = $region44
        $region43: #{tpu_custom_call.1} parent=23 // pred_region
          %s334 = smul.u32 2, %s29
          %s336 = ssub.s32 32, 32
          %337 = vsyncadd %s311, %s336
          %s338 = smul.addr %s28, 2
          %s339 = sadd.s32 %s334, %s338
          %s340 = smul.addr %s339, 16
          %s341 = scalar_lea.hbm %s2, %s340
          %s343 = sshll.u32 %s314, 4
          %s344 = int_to_ptr.vmem [resolvable:$true] %s343
          %346 = dma.vmem_to_hbm [thread:$0]  %s344, 32, %s341, %s311
        $region44: #{tpu_custom_call.1} parent=23 // pred_fallthru
          _
      $region24: #{tpu_custom_call.1} parent=5 // pred_fallthru
        _
      %p347 = scmp.le.s32.totalorder 2, %s18
      // Predicated region
      $region45: #{tpu_custom_call.1} parent=5 // pred_check
        %p348 = pneg %p347
      $region46: #{tpu_custom_call.1} parent=5 // pred_check_branch
        %350 = sbr.rel (%p348) target = $region48
      $region47: #{tpu_custom_call.1} parent=5 // pred_region
        %s351 = ssub.s32 %s18, 2
        // Predicated region
        $region49: #{tpu_custom_call.1} parent=47 // pred_check
          %p352 = pneg %p98
        $region50: #{tpu_custom_call.1} parent=47 // pred_check_branch
          %354 = sbr.rel (%p352) target = $region52
        $region51: #{tpu_custom_call.1} parent=47 // pred_region
          %s355 = sand.u32 %s83, 1
          %s356 = scalar_lea.sflag [#allocation6], %s355
          %s357 = sand.u32 %s83, 1
          %s358 = smul.addr %s357, 2
          %s359 = scalar_lea.vmem [#allocation7], %s358
          %360 = dma.done %s356, 32
        $region52: #{tpu_custom_call.1} parent=47 // pred_fallthru
          _
        // Predicated region
        $region53: #{tpu_custom_call.1} parent=47 // pred_check
          %p361 = pneg %p126
        $region54: #{tpu_custom_call.1} parent=47 // pred_check_branch
          %363 = sbr.rel (%p361) target = $region56
        $region55: #{tpu_custom_call.1} parent=47 // pred_region
          %s364 = sand.u32 %s111, 1
          %s365 = scalar_lea.sflag [#allocation9], %s364
          %s366 = sand.u32 %s111, 1
          %s367 = smul.addr %s366, 2
          %s368 = scalar_lea.vmem [#allocation8], %s367
          %369 = dma.done %s365, 32
        $region56: #{tpu_custom_call.1} parent=47 // pred_fallthru
          _
      $region48: #{tpu_custom_call.1} parent=5 // pred_fallthru
        _
    $region6: #{tpu_custom_call.1} parent=1 // loop_footer
      %s22 = sadd.s32 1, %s18
    $region7: #{tpu_custom_call.1} parent=1 // loop_footer_branch
      %17 = sbr.rel target = $region3
    $region8: #{tpu_custom_call.1} parent=1 // loop_exit
      _
    %370 = vsyncpa [#allocation5], 1
    %s371 = scalar_lea.sflag [#allocation5], 1
    %372 = vsyncpa %s371, 1
    %373 = vsyncpa [#allocation6], 1
    %s374 = scalar_lea.sflag [#allocation6], 1
    %375 = vsyncpa %s374, 1
    %376 = vsyncpa [#allocation9], 1
    %s377 = scalar_lea.sflag [#allocation9], 1
    %378 = vsyncpa %s377, 1

</llo_original>
